<compile_context>
chip_gen: v5e
topology: v5e:2x2
jax: 0.10.0
libtpu: 0.0.40
codegen_flags: <defaults>
</compile_context>

<pallas_src>
import functools

import jax
import jax.numpy as jnp
from jax import lax
from jax.experimental import pallas as pl
from jax.experimental.pallas import tpu as pltpu


# -----------------------------------------------------------------------------------
# Fused kernel: projection -> mixed scores -> softmax(batch) -> context -> ELU -> Linear
# -----------------------------------------------------------------------------------
def _motif_attention_kernel(x2_ref, xp_ref, wrseg_ref, q2_ref, seg_ref, w_ref, b_ref,
                            o_ref, *, B, N, H, Dh):
    D = H * Dh

    # ---- 1) per-head projection: a1[m = b*N+n, h] = sum_d x[b,n,h*Dh+d] * Wr[h,d] ----
    # One D-wide contraction (x lane-dense) instead of H tiny Dh-wide mat-vecs.
    a1 = lax.dot_general(x2_ref[...], wrseg_ref[...],
                         (((1,), (0,)), ((), ())),
                         preferred_element_type=jnp.float32)            # (B*N, H)

    # ---- 2) scores under the torch head/batch-mixing view, softmax over the batch ----
    # qm1[h', b', :] = a1[h_src, b_src, :]  with  h_src*B + b_src = b'*H + h'.
    q2 = q2_ref[...]                                                    # (H, N)
    V = []
    for b_src in range(B):                                              # tiny static loop
        blk = a1[b_src * N:(b_src + 1) * N, :]                          # (N, H)
        V.append(lax.dot_general(q2, blk, (((1,), (0,)), ((), ())),
                                 preferred_element_type=jnp.float32))   # (H', H)
    row_ids = lax.broadcasted_iota(jnp.int32, (B, H), 0)
    col_ids = lax.broadcasted_iota(jnp.int32, (B, H), 1)
    scores = jnp.zeros((B, H), jnp.float32)
    for bp in range(B):
        for hp in range(H):
            k = bp * H + hp
            h_src, b_src = k // B, k % B
            val = V[b_src][hp:hp + 1, h_src:h_src + 1]                  # (1, 1)
            scores = scores + jnp.where((row_ids == bp) & (col_ids == hp), val, 0.0)
    # softmax over the batch axis (torch: softmax(scores, dim=-2) on (H, B, 1))
    scores = scores - jnp.max(scores, axis=0, keepdims=True)
    e = jnp.exp(scores)
    attn = e / jnp.sum(e, axis=0, keepdims=True)                        # (B, H)

    # ---- 3) context + ELU: lane-dense weighted sum over the batch axis (pure VPU) ----
    # attn_d[b, h*Dh + d] = attn[b, h]
    attn_d = lax.dot_general(attn, seg_ref[...], (((1,), (0,)), ((), ())),
                             preferred_element_type=jnp.float32)        # (B, D)
    y = jnp.zeros((N, D), jnp.float32)
    for bpp in range(B):
        y = y + xp_ref[bpp] * attn_d[bpp:bpp + 1, :]                    # (N,D) += (N,D)*(1,D)
    # ELU (alpha = 1.0)
    y = jnp.where(y > 0, y, jnp.exp(jnp.minimum(y, 0.0)) - 1.0)

    # ---- 4) output Linear: out = y @ W^T + b  (W untransposed, contract its dim 1) ----
    o_ref[...] = (lax.dot_general(y, w_ref[...], (((1,), (1,)), ((), ())),
                                  preferred_element_type=jnp.float32)
                  + b_ref[...]).astype(o_ref.dtype)


# -----------------------------------------------------------------------------------
# Wrapper: parameter-side prep + the one faithful activation permutation, then 1 kernel
# -----------------------------------------------------------------------------------
def motif_attention(x, Wr, q, W_lin, b_lin, *, heads_num):
    """MotifAttention.forward.  x: (B, N, D) -> (N, D)."""
    B, N, D = x.shape
    H = heads_num
    Dh = D // H
    dt = x.dtype

    # ---- parameter-side prep (tiny, shape-only / one-time) ----
    eye_h = jnp.eye(H, dtype=dt)
    wr2 = Wr.reshape(H, Dh).astype(dt)
    # block-"diagonal" Wr:  wrseg[h*Dh + d, h] = Wr[h, d]
    wrseg = (wr2[:, :, None] * eye_h[:, None, :]).reshape(D, H)
    # head -> channel expander:  seg_e[h, h*Dh + d] = 1
    seg_e = (eye_h[:, :, None] * jnp.ones((Dh,), dt)).reshape(H, D)
    q2 = q.reshape(H, N).astype(dt)
    b2 = b_lin.reshape(1, D).astype(dt)

    # ---- activation-side layout plumbing ----
    x2 = x.reshape(B * N, D)                                 # free view, D on lanes
    # TODO(synk): this single element-permutation of x reproduces, bit-faithfully, the torch
    # view chain qm.transpose(0,2).transpose(-1,-2).reshape(H,N*Dh,B) (which mixes head and
    # batch indices); arbitrary element-order reshapes have no clean in-kernel Mosaic
    # lowering, so this one copy is left to XLA.  The layout is chosen so the kernel sees it
    # lane-dense: output channel (h*Dh+d) on lanes, batch (the reduction axis) outermost.
    xperm = jnp.transpose(x.reshape(B, N, H, Dh), (1, 0, 3, 2)).reshape(H, N, Dh, B)
    xp = jnp.transpose(xperm, (3, 1, 0, 2)).reshape(B, N, D)

    kernel = functools.partial(_motif_attention_kernel, B=B, N=N, H=H, Dh=Dh)
    return pl.pallas_call(
        kernel,
        out_shape=jax.ShapeDtypeStruct((N, D), dt),
        grid=(1,),
        in_specs=[
            pl.BlockSpec((B * N, D), lambda i: (0, 0)),
            pl.BlockSpec((B, N, D), lambda i: (0, 0, 0)),
            pl.BlockSpec((D, H), lambda i: (0, 0)),
            pl.BlockSpec((H, N), lambda i: (0, 0)),
            pl.BlockSpec((H, D), lambda i: (0, 0)),
            pl.BlockSpec((D, D), lambda i: (0, 0)),
            pl.BlockSpec((1, D), lambda i: (0, 0)),
        ],
        out_specs=pl.BlockSpec((N, D), lambda i: (0, 0)),
        compiler_params=pltpu.CompilerParams(dimension_semantics=("arbitrary",)),
    )(x2, xp, wrseg, q2, seg_e, W_lin, b2)


# -----------------------------------------------------------------------------------
# Pure-JAX reference mirroring the torch op sequence (for validation)
# -----------------------------------------------------------------------------------
def motif_attention_reference(x, Wr, q, W_lin, b_lin, heads_num):
    prec = lax.Precision.HIGHEST
    B, N, D = x.shape
    H = heads_num
    Dh = D // H
    qm = jnp.swapaxes(jnp.swapaxes(x.reshape(B, N, H, Dh), 1, 2), 0, 1)      # (H,B,N,Dh)
    a1 = jnp.matmul(qm.reshape(H, B * N, Dh), Wr, precision=prec)            # (H,B*N,1)
    qm1 = jnp.swapaxes(a1.reshape(B, -1, N), 0, 1)                           # (H,B,N)
    scores = jnp.matmul(qm1, q, precision=prec)                              # (H,B,1)
    attn = jax.nn.softmax(scores, axis=-2)
    t = jnp.swapaxes(jnp.swapaxes(qm, 0, 2), -1, -2).reshape(H, N * Dh, B)
    ctx = jax.nn.elu(jnp.matmul(t, attn, precision=prec))                    # (H,N*Dh,1)
    y = jnp.swapaxes(ctx.reshape(H, N, Dh), 0, 1).reshape(N, D)
    return jnp.matmul(y, W_lin.T, precision=prec) + b_lin


if __name__ == "__main__":
    batch, node_num, input_dim, heads_num = 2, 8, 32, 4

    key = jax.random.PRNGKey(0)
    kx, kwr, kq, kw, kb = jax.random.split(key, 5)
    x = jax.random.normal(kx, (batch, node_num, input_dim), dtype=jnp.float32)
    Wr = jax.random.normal(kwr, (heads_num, input_dim // heads_num, 1), dtype=jnp.float32)
    q = jax.random.normal(kq, (heads_num, node_num, 1), dtype=jnp.float32)
    # nn.Linear(input_dim, input_dim): weight (D, D), bias (D,)
    bound = 1.0 / (input_dim ** 0.5)
    W_lin = jax.random.uniform(kw, (input_dim, input_dim), jnp.float32, -bound, bound)
    b_lin = jax.random.uniform(kb, (input_dim,), jnp.float32, -bound, bound)

    fwd = jax.jit(functools.partial(motif_attention, heads_num=heads_num))
    out = jax.block_until_ready(fwd(x, Wr, q, W_lin, b_lin))

    ref = motif_attention_reference(x, Wr, q, W_lin, b_lin, heads_num)
    assert out.shape == ref.shape == (node_num, input_dim), (out.shape, ref.shape)
    assert jnp.allclose(out, ref, atol=1e-4, rtol=1e-4), float(jnp.max(jnp.abs(out - ref)))

    print("KERNEL_OK")
</pallas_src>

<mosaic_0001>
module attributes {stable_mosaic.version = 11 : i64} {
  func.func @_motif_attention_kernel(%arg0: i32, %arg1: memref<16x32xf32, #tpu.memory_space<vmem>>, %arg2: memref<2x8x32xf32, #tpu.memory_space<vmem>>, %arg3: memref<32x4xf32, #tpu.memory_space<vmem>>, %arg4: memref<4x8xf32, #tpu.memory_space<vmem>>, %arg5: memref<4x32xf32, #tpu.memory_space<vmem>>, %arg6: memref<32x32xf32, #tpu.memory_space<vmem>>, %arg7: memref<1x32xf32, #tpu.memory_space<vmem>>, %arg8: memref<8x32xf32, #tpu.memory_space<vmem>>) attributes {dimension_semantics = [#tpu.dimension_semantics<arbitrary>], iteration_bounds = array<i64: 1>, scalar_prefetch = 0 : i64, scratch_operands = 0 : i64, tpu.core_type = #tpu.core_type<tc>, window_params = [{pipeline_mode = #tpu.pipeline_mode<synchronous>, transform_indices = @transform_0, window_bounds = array<i64: 16, 32>}, {pipeline_mode = #tpu.pipeline_mode<synchronous>, transform_indices = @transform_1, window_bounds = array<i64: 2, 8, 32>}, {pipeline_mode = #tpu.pipeline_mode<synchronous>, transform_indices = @transform_2, window_bounds = array<i64: 32, 4>}, {pipeline_mode = #tpu.pipeline_mode<synchronous>, transform_indices = @transform_3, window_bounds = array<i64: 4, 8>}, {pipeline_mode = #tpu.pipeline_mode<synchronous>, transform_indices = @transform_4, window_bounds = array<i64: 4, 32>}, {pipeline_mode = #tpu.pipeline_mode<synchronous>, transform_indices = @transform_5, window_bounds = array<i64: 32, 32>}, {pipeline_mode = #tpu.pipeline_mode<synchronous>, transform_indices = @transform_6, window_bounds = array<i64: 1, 32>}, {pipeline_mode = #tpu.pipeline_mode<synchronous>, transform_indices = @transform_7, window_bounds = array<i64: 8, 32>}]} {
    %c0 = arith.constant 0 : index
    %c0_0 = arith.constant 0 : index
    %0 = vector.load %arg1[%c0, %c0_0] : memref<16x32xf32, #tpu.memory_space<vmem>>, vector<16x32xf32>
    %c0_1 = arith.constant 0 : index
    %c0_2 = arith.constant 0 : index
    %1 = vector.load %arg3[%c0_1, %c0_2] : memref<32x4xf32, #tpu.memory_space<vmem>>, vector<32x4xf32>
    %cst = arith.constant dense<0.000000e+00> : vector<16x4xf32>
    %2 = tpu.matmul %0, %1, %cst {dimension_numbers = #tpu.dot_dimension_numbers<[1], [0], [0], [1], [0, 0, 1, 1], [], []>} : vector<16x32xf32>, vector<32x4xf32>, vector<16x4xf32> -> vector<16x4xf32>
    %c0_3 = arith.constant 0 : index
    %c0_4 = arith.constant 0 : index
    %3 = vector.load %arg4[%c0_3, %c0_4] : memref<4x8xf32, #tpu.memory_space<vmem>>, vector<4x8xf32>
    %4 = vector.extract_strided_slice %2 {offsets = [0, 0], sizes = [8, 4], strides = [1, 1]} : vector<16x4xf32> to vector<8x4xf32>
    %cst_5 = arith.constant dense<0.000000e+00> : vector<4x4xf32>
    %5 = tpu.matmul %3, %4, %cst_5 {dimension_numbers = #tpu.dot_dimension_numbers<[1], [0], [0], [1], [0, 0, 1, 1], [], []>} : vector<4x8xf32>, vector<8x4xf32>, vector<4x4xf32> -> vector<4x4xf32>
    %6 = vector.extract_strided_slice %2 {offsets = [8, 0], sizes = [8, 4], strides = [1, 1]} : vector<16x4xf32> to vector<8x4xf32>
    %cst_6 = arith.constant dense<0.000000e+00> : vector<4x4xf32>
    %7 = tpu.matmul %3, %6, %cst_6 {dimension_numbers = #tpu.dot_dimension_numbers<[1], [0], [0], [1], [0, 0, 1, 1], [], []>} : vector<4x8xf32>, vector<8x4xf32>, vector<4x4xf32> -> vector<4x4xf32>
    %8 = tpu.iota {dimensions = array<i32: 0>} : vector<2x4xi32>
    %9 = tpu.iota {dimensions = array<i32: 1>} : vector<2x4xi32>
    %cst_7 = arith.constant 0.000000e+00 : f32
    %10 = vector.broadcast %cst_7 : f32 to vector<2x4xf32>
    %11 = vector.extract_strided_slice %5 {offsets = [0, 0], sizes = [1, 1], strides = [1, 1]} : vector<4x4xf32> to vector<1x1xf32>
    %c0_i32 = arith.constant 0 : i32
    %12 = vector.broadcast %c0_i32 : i32 to vector<2x4xi32>
    %13 = arith.cmpi eq, %8, %12 : vector<2x4xi32>
    %c0_i32_8 = arith.constant 0 : i32
    %14 = vector.broadcast %c0_i32_8 : i32 to vector<2x4xi32>
    %15 = arith.cmpi eq, %9, %14 : vector<2x4xi32>
    %16 = arith.andi %13, %15 : vector<2x4xi1>
    %cst_9 = arith.constant 0.000000e+00 : f32
    %17 = vector.shape_cast %11 : vector<1x1xf32> to vector<1x1xf32>
    %18 = vector.broadcast %17 : vector<1x1xf32> to vector<2x4xf32>
    %19 = vector.broadcast %cst_9 : f32 to vector<2x4xf32>
    %20 = arith.select %16, %18, %19 : vector<2x4xi1>, vector<2x4xf32>
    %21 = arith.addf %10, %20 : vector<2x4xf32>
    %22 = vector.extract_strided_slice %7 {offsets = [1, 0], sizes = [1, 1], strides = [1, 1]} : vector<4x4xf32> to vector<1x1xf32>
    %c0_i32_10 = arith.constant 0 : i32
    %23 = vector.broadcast %c0_i32_10 : i32 to vector<2x4xi32>
    %24 = arith.cmpi eq, %8, %23 : vector<2x4xi32>
    %c1_i32 = arith.constant 1 : i32
    %25 = vector.broadcast %c1_i32 : i32 to vector<2x4xi32>
    %26 = arith.cmpi eq, %9, %25 : vector<2x4xi32>
    %27 = arith.andi %24, %26 : vector<2x4xi1>
    %cst_11 = arith.constant 0.000000e+00 : f32
    %28 = vector.shape_cast %22 : vector<1x1xf32> to vector<1x1xf32>
    %29 = vector.broadcast %28 : vector<1x1xf32> to vector<2x4xf32>
    %30 = vector.broadcast %cst_11 : f32 to vector<2x4xf32>
    %31 = arith.select %27, %29, %30 : vector<2x4xi1>, vector<2x4xf32>
    %32 = arith.addf %21, %31 : vector<2x4xf32>
    %33 = vector.extract_strided_slice %5 {offsets = [2, 1], sizes = [1, 1], strides = [1, 1]} : vector<4x4xf32> to vector<1x1xf32>
    %c0_i32_12 = arith.constant 0 : i32
    %34 = vector.broadcast %c0_i32_12 : i32 to vector<2x4xi32>
    %35 = arith.cmpi eq, %8, %34 : vector<2x4xi32>
    %c2_i32 = arith.constant 2 : i32
    %36 = vector.broadcast %c2_i32 : i32 to vector<2x4xi32>
    %37 = arith.cmpi eq, %9, %36 : vector<2x4xi32>
    %38 = arith.andi %35, %37 : vector<2x4xi1>
    %cst_13 = arith.constant 0.000000e+00 : f32
    %39 = vector.shape_cast %33 : vector<1x1xf32> to vector<1x1xf32>
    %40 = vector.broadcast %39 : vector<1x1xf32> to vector<2x4xf32>
    %41 = vector.broadcast %cst_13 : f32 to vector<2x4xf32>
    %42 = arith.select %38, %40, %41 : vector<2x4xi1>, vector<2x4xf32>
    %43 = arith.addf %32, %42 : vector<2x4xf32>
    %44 = vector.extract_strided_slice %7 {offsets = [3, 1], sizes = [1, 1], strides = [1, 1]} : vector<4x4xf32> to vector<1x1xf32>
    %c0_i32_14 = arith.constant 0 : i32
    %45 = vector.broadcast %c0_i32_14 : i32 to vector<2x4xi32>
    %46 = arith.cmpi eq, %8, %45 : vector<2x4xi32>
    %c3_i32 = arith.constant 3 : i32
    %47 = vector.broadcast %c3_i32 : i32 to vector<2x4xi32>
    %48 = arith.cmpi eq, %9, %47 : vector<2x4xi32>
    %49 = arith.andi %46, %48 : vector<2x4xi1>
    %cst_15 = arith.constant 0.000000e+00 : f32
    %50 = vector.shape_cast %44 : vector<1x1xf32> to vector<1x1xf32>
    %51 = vector.broadcast %50 : vector<1x1xf32> to vector<2x4xf32>
    %52 = vector.broadcast %cst_15 : f32 to vector<2x4xf32>
    %53 = arith.select %49, %51, %52 : vector<2x4xi1>, vector<2x4xf32>
    %54 = arith.addf %43, %53 : vector<2x4xf32>
    %55 = vector.extract_strided_slice %5 {offsets = [0, 2], sizes = [1, 1], strides = [1, 1]} : vector<4x4xf32> to vector<1x1xf32>
    %c1_i32_16 = arith.constant 1 : i32
    %56 = vector.broadcast %c1_i32_16 : i32 to vector<2x4xi32>
    %57 = arith.cmpi eq, %8, %56 : vector<2x4xi32>
    %c0_i32_17 = arith.constant 0 : i32
    %58 = vector.broadcast %c0_i32_17 : i32 to vector<2x4xi32>
    %59 = arith.cmpi eq, %9, %58 : vector<2x4xi32>
    %60 = arith.andi %57, %59 : vector<2x4xi1>
    %cst_18 = arith.constant 0.000000e+00 : f32
    %61 = vector.shape_cast %55 : vector<1x1xf32> to vector<1x1xf32>
    %62 = vector.broadcast %61 : vector<1x1xf32> to vector<2x4xf32>
    %63 = vector.broadcast %cst_18 : f32 to vector<2x4xf32>
    %64 = arith.select %60, %62, %63 : vector<2x4xi1>, vector<2x4xf32>
    %65 = arith.addf %54, %64 : vector<2x4xf32>
    %66 = vector.extract_strided_slice %7 {offsets = [1, 2], sizes = [1, 1], strides = [1, 1]} : vector<4x4xf32> to vector<1x1xf32>
    %c1_i32_19 = arith.constant 1 : i32
    %67 = vector.broadcast %c1_i32_19 : i32 to vector<2x4xi32>
    %68 = arith.cmpi eq, %8, %67 : vector<2x4xi32>
    %c1_i32_20 = arith.constant 1 : i32
    %69 = vector.broadcast %c1_i32_20 : i32 to vector<2x4xi32>
    %70 = arith.cmpi eq, %9, %69 : vector<2x4xi32>
    %71 = arith.andi %68, %70 : vector<2x4xi1>
    %cst_21 = arith.constant 0.000000e+00 : f32
    %72 = vector.shape_cast %66 : vector<1x1xf32> to vector<1x1xf32>
    %73 = vector.broadcast %72 : vector<1x1xf32> to vector<2x4xf32>
    %74 = vector.broadcast %cst_21 : f32 to vector<2x4xf32>
    %75 = arith.select %71, %73, %74 : vector<2x4xi1>, vector<2x4xf32>
    %76 = arith.addf %65, %75 : vector<2x4xf32>
    %77 = vector.extract_strided_slice %5 {offsets = [2, 3], sizes = [1, 1], strides = [1, 1]} : vector<4x4xf32> to vector<1x1xf32>
    %c1_i32_22 = arith.constant 1 : i32
    %78 = vector.broadcast %c1_i32_22 : i32 to vector<2x4xi32>
    %79 = arith.cmpi eq, %8, %78 : vector<2x4xi32>
    %c2_i32_23 = arith.constant 2 : i32
    %80 = vector.broadcast %c2_i32_23 : i32 to vector<2x4xi32>
    %81 = arith.cmpi eq, %9, %80 : vector<2x4xi32>
    %82 = arith.andi %79, %81 : vector<2x4xi1>
    %cst_24 = arith.constant 0.000000e+00 : f32
    %83 = vector.shape_cast %77 : vector<1x1xf32> to vector<1x1xf32>
    %84 = vector.broadcast %83 : vector<1x1xf32> to vector<2x4xf32>
    %85 = vector.broadcast %cst_24 : f32 to vector<2x4xf32>
    %86 = arith.select %82, %84, %85 : vector<2x4xi1>, vector<2x4xf32>
    %87 = arith.addf %76, %86 : vector<2x4xf32>
    %88 = vector.extract_strided_slice %7 {offsets = [3, 3], sizes = [1, 1], strides = [1, 1]} : vector<4x4xf32> to vector<1x1xf32>
    %c1_i32_25 = arith.constant 1 : i32
    %89 = vector.broadcast %c1_i32_25 : i32 to vector<2x4xi32>
    %90 = arith.cmpi eq, %8, %89 : vector<2x4xi32>
    %c3_i32_26 = arith.constant 3 : i32
    %91 = vector.broadcast %c3_i32_26 : i32 to vector<2x4xi32>
    %92 = arith.cmpi eq, %9, %91 : vector<2x4xi32>
    %93 = arith.andi %90, %92 : vector<2x4xi1>
    %cst_27 = arith.constant 0.000000e+00 : f32
    %94 = vector.shape_cast %88 : vector<1x1xf32> to vector<1x1xf32>
    %95 = vector.broadcast %94 : vector<1x1xf32> to vector<2x4xf32>
    %96 = vector.broadcast %cst_27 : f32 to vector<2x4xf32>
    %97 = arith.select %93, %95, %96 : vector<2x4xi1>, vector<2x4xf32>
    %98 = arith.addf %87, %97 : vector<2x4xf32>
    %cst_28 = arith.constant dense<0xFF800000> : vector<4xf32>
    %99 = vector.multi_reduction <maximumf>, %98, %cst_28 [0] : vector<2x4xf32> to vector<4xf32>
    %100 = vector.shape_cast %99 : vector<4xf32> to vector<1x4xf32>
    %101 = vector.broadcast %100 : vector<1x4xf32> to vector<2x4xf32>
    %102 = arith.subf %98, %101 : vector<2x4xf32>
    %103 = math.exp %102 : vector<2x4xf32>
    %cst_29 = arith.constant dense<0.000000e+00> : vector<4xf32>
    %104 = vector.multi_reduction <add>, %103, %cst_29 [0] : vector<2x4xf32> to vector<4xf32>
    %105 = vector.shape_cast %104 : vector<4xf32> to vector<1x4xf32>
    %106 = vector.broadcast %105 : vector<1x4xf32> to vector<2x4xf32>
    %107 = arith.divf %103, %106 : vector<2x4xf32>
    %c0_30 = arith.constant 0 : index
    %c0_31 = arith.constant 0 : index
    %108 = vector.load %arg5[%c0_30, %c0_31] : memref<4x32xf32, #tpu.memory_space<vmem>>, vector<4x32xf32>
    %cst_32 = arith.constant dense<0.000000e+00> : vector<2x32xf32>
    %109 = tpu.matmul %107, %108, %cst_32 {dimension_numbers = #tpu.dot_dimension_numbers<[1], [0], [0], [1], [0, 0, 1, 1], [], []>} : vector<2x4xf32>, vector<4x32xf32>, vector<2x32xf32> -> vector<2x32xf32>
    %cst_33 = arith.constant 0.000000e+00 : f32
    %110 = vector.broadcast %cst_33 : f32 to vector<8x32xf32>
    %c0_34 = arith.constant 0 : index
    %c0_35 = arith.constant 0 : index
    %c0_36 = arith.constant 0 : index
    %111 = vector.load %arg2[%c0_34, %c0_35, %c0_36] : memref<2x8x32xf32, #tpu.memory_space<vmem>>, vector<1x8x32xf32>
    %112 = vector.shape_cast %111 : vector<1x8x32xf32> to vector<8x32xf32>
    %113 = vector.extract_strided_slice %109 {offsets = [0, 0], sizes = [1, 32], strides = [1, 1]} : vector<2x32xf32> to vector<1x32xf32>
    %114 = vector.broadcast %113 : vector<1x32xf32> to vector<8x32xf32>
    %115 = arith.mulf %112, %114 : vector<8x32xf32>
    %116 = arith.addf %110, %115 : vector<8x32xf32>
    %c1 = arith.constant 1 : index
    %c0_37 = arith.constant 0 : index
    %c0_38 = arith.constant 0 : index
    %117 = vector.load %arg2[%c1, %c0_37, %c0_38] : memref<2x8x32xf32, #tpu.memory_space<vmem>>, vector<1x8x32xf32>
    %118 = vector.shape_cast %117 : vector<1x8x32xf32> to vector<8x32xf32>
    %119 = vector.extract_strided_slice %109 {offsets = [1, 0], sizes = [1, 32], strides = [1, 1]} : vector<2x32xf32> to vector<1x32xf32>
    %120 = vector.broadcast %119 : vector<1x32xf32> to vector<8x32xf32>
    %121 = arith.mulf %118, %120 : vector<8x32xf32>
    %122 = arith.addf %116, %121 : vector<8x32xf32>
    %cst_39 = arith.constant 0.000000e+00 : f32
    %123 = vector.broadcast %cst_39 : f32 to vector<8x32xf32>
    %124 = arith.cmpf ogt, %122, %123 : vector<8x32xf32>
    %cst_40 = arith.constant 0.000000e+00 : f32
    %125 = vector.broadcast %cst_40 : f32 to vector<8x32xf32>
    %126 = arith.minimumf %122, %125 : vector<8x32xf32>
    %127 = math.exp %126 : vector<8x32xf32>
    %cst_41 = arith.constant 1.000000e+00 : f32
    %128 = vector.broadcast %cst_41 : f32 to vector<8x32xf32>
    %129 = arith.subf %127, %128 : vector<8x32xf32>
    %130 = arith.select %124, %122, %129 : vector<8x32xi1>, vector<8x32xf32>
    %c0_42 = arith.constant 0 : index
    %c0_43 = arith.constant 0 : index
    %131 = vector.load %arg6[%c0_42, %c0_43] : memref<32x32xf32, #tpu.memory_space<vmem>>, vector<32x32xf32>
    %cst_44 = arith.constant dense<0.000000e+00> : vector<8x32xf32>
    %132 = tpu.matmul %130, %131, %cst_44 {dimension_numbers = #tpu.dot_dimension_numbers<[1], [1], [0], [0], [0, 0, 1, 0], [], []>} : vector<8x32xf32>, vector<32x32xf32>, vector<8x32xf32> -> vector<8x32xf32>
    %c0_45 = arith.constant 0 : index
    %c0_46 = arith.constant 0 : index
    %133 = vector.load %arg7[%c0_45, %c0_46] : memref<1x32xf32, #tpu.memory_space<vmem>>, vector<1x32xf32>
    %134 = vector.broadcast %133 : vector<1x32xf32> to vector<8x32xf32>
    %135 = arith.addf %132, %134 : vector<8x32xf32>
    %c0_47 = arith.constant 0 : index
    %c0_48 = arith.constant 0 : index
    %136 = vector.load %arg8[%c0_47, %c0_48] : memref<8x32xf32, #tpu.memory_space<vmem>>, vector<8x32xf32>
    tpu.vector_store %arg8[%c0_47, %c0_48], %135 {strides = array<i32>} : memref<8x32xf32, #tpu.memory_space<vmem>>, vector<8x32xf32>,
    return
  }
  func.func @transform_0(%arg0: i32) -> (i32, i32) {
    %c0_i32 = arith.constant 0 : i32
    %c0_i32_0 = arith.constant 0 : i32
    %c0_i32_1 = arith.constant 0 : i32
    return %c0_i32, %c0_i32_0 : i32, i32
  }
  func.func @transform_1(%arg0: i32) -> (i32, i32, i32) {
    %c0_i32 = arith.constant 0 : i32
    %c0_i32_0 = arith.constant 0 : i32
    %c0_i32_1 = arith.constant 0 : i32
    %c0_i32_2 = arith.constant 0 : i32
    return %c0_i32, %c0_i32_0, %c0_i32_1 : i32, i32, i32
  }
  func.func @transform_2(%arg0: i32) -> (i32, i32) {
    %c0_i32 = arith.constant 0 : i32
    %c0_i32_0 = arith.constant 0 : i32
    %c0_i32_1 = arith.constant 0 : i32
    return %c0_i32, %c0_i32_0 : i32, i32
  }
  func.func @transform_3(%arg0: i32) -> (i32, i32) {
    %c0_i32 = arith.constant 0 : i32
    %c0_i32_0 = arith.constant 0 : i32
    %c0_i32_1 = arith.constant 0 : i32
    return %c0_i32, %c0_i32_0 : i32, i32
  }
  func.func @transform_4(%arg0: i32) -> (i32, i32) {
    %c0_i32 = arith.constant 0 : i32
    %c0_i32_0 = arith.constant 0 : i32
    %c0_i32_1 = arith.constant 0 : i32
    return %c0_i32, %c0_i32_0 : i32, i32
  }
  func.func @transform_5(%arg0: i32) -> (i32, i32) {
    %c0_i32 = arith.constant 0 : i32
    %c0_i32_0 = arith.constant 0 : i32
    %c0_i32_1 = arith.constant 0 : i32
    return %c0_i32, %c0_i32_0 : i32, i32
  }
  func.func @transform_6(%arg0: i32) -> (i32, i32) {
    %c0_i32 = arith.constant 0 : i32
    %c0_i32_0 = arith.constant 0 : i32
    %c0_i32_1 = arith.constant 0 : i32
    return %c0_i32, %c0_i32_0 : i32, i32
  }
  func.func @transform_7(%arg0: i32) -> (i32, i32) {
    %c0_i32 = arith.constant 0 : i32
    %c0_i32_0 = arith.constant 0 : i32
    %c0_i32_1 = arith.constant 0 : i32
    return %c0_i32, %c0_i32_0 : i32, i32
  }
}

</mosaic_0001>

<llo_original>
// kernel: mul.19
$region0: #{mul.19}
  #allocation0 [shape = 's32[1]{0}', space=sflag, size = 0x4, scoped, tag = 'scoped memory for mul.19']
  %s0 = inlined_call_operand.vmem [shape: f32[4,4], index: 0, kind: input, shape index: {}]
  %s1 = inlined_call_operand.vmem [shape: f32[4,4,8], index: 1, kind: output, shape index: {}]
  // Predicated region
  $region2: #{mul.19} parent=0 // pred_check
    _
  $region3: #{mul.19} parent=0 // pred_check_branch
    %3 = sbr.rel (0) target = $region5
  $region4: #{mul.19} parent=0 // pred_region
    _
  $region5: #{mul.19} parent=0 // pred_fallthru
    _
  %v4 = vld [vmem:[%s0] ss:$0 sm:$0xff]
  %v5 = vlaneseq
  %v6 = vshrl.u32 %v5, 7
  %8 = vset.pattern.permute.xlu0 %v6
  %9 = vperm.xlu0 %8, %v4
  %v10 = vpop.permute.xlu0 %9
  %11 = vst [vmem:[%s1] sm:$0xf] %v10
  %s12 = scalar_lea.vmem %s0, 1
  %v13 = vld [vmem:[%s12] ss:$0 sm:$0xff]
  %v14 = vlaneseq
  %v15 = vshrl.u32 %v14, 7
  %17 = vset.pattern.permute.xlu0 %v15
  %18 = vperm.xlu0 %17, %v13
  %v19 = vpop.permute.xlu0 %18
  %s20 = scalar_lea.vmem %s1, 4
  %21 = vst [vmem:[%s20] sm:$0xf] %v19
  %s22 = scalar_lea.vmem %s0, 2
  %v23 = vld [vmem:[%s22] ss:$0 sm:$0xff]
  %v24 = vlaneseq
  %v25 = vshrl.u32 %v24, 7
  %27 = vset.pattern.permute.xlu0 %v25
  %28 = vperm.xlu0 %27, %v23
  %v29 = vpop.permute.xlu0 %28
  %s30 = scalar_lea.vmem %s1, 8
  %31 = vst [vmem:[%s30] sm:$0xf] %v29
  %s32 = scalar_lea.vmem %s0, 3
  %v33 = vld [vmem:[%s32] ss:$0 sm:$0xff]
  %v34 = vlaneseq
  %v35 = vshrl.u32 %v34, 7
  %37 = vset.pattern.permute.xlu0 %v35
  %38 = vperm.xlu0 %37, %v33
  %v39 = vpop.permute.xlu0 %38
  %s40 = scalar_lea.vmem %s1, 12
  %41 = vst [vmem:[%s40] sm:$0xf] %v39

// kernel: motif_attention.1
$region0: #{motif_attention.1}
  #allocation0 [shape = 'u32[]', space=smem, size = 0x4, offset = 0x4, fixed_abs, tag = 'smem constant byte address 0x4 - core index']
  #allocation1 [shape = 'u32[72,128]{1,0:T(1,128)}', space=vmem, size = 0x9000, scoped, tag = 'internal scratch']
  %s0 = inlined_call_operand.vmem [shape: f32[16,32], index: 0, kind: input, shape index: {}]
  %s1 = inlined_call_operand.vmem [shape: f32[2,8,32], index: 1, kind: input, shape index: {}]
  %s2 = inlined_call_operand.vmem [shape: f32[32,4], index: 2, kind: input, shape index: {}]
  %s3 = inlined_call_operand.vmem [shape: f32[4,8], index: 3, kind: input, shape index: {}]
  %s4 = inlined_call_operand.vmem [shape: f32[4,32], index: 4, kind: input, shape index: {}]
  %s5 = inlined_call_operand.vmem [shape: f32[32,32], index: 5, kind: input, shape index: {}]
  %s6 = inlined_call_operand.vmem [shape: f32[1,32], index: 6, kind: input, shape index: {}]
  %s7 = inlined_call_operand.hbm [shape: f32[8,32], index: 7, kind: output, shape index: {}]
  %s8 = sld [smem:[#allocation0]]
  $region38: #{motif_attention.1} parent=0
    _
  %s10 = ssub.s32 1, %s8
  %s11 = scalar_select 0, %s10, %s8
  $region1: #{motif_attention.1} parent=0
    #allocation2 [shape = 'u8[4096]{0}', space=vmem, size = 0x1000, scoped, tag = 'output window, operand 0, single buffered']
    #allocation3 [shape = 's32[1]{0}', space=sflag, size = 0x4, scoped, tag = 'scoped memory for motif_attention.1']
    %12 = vsyncpa [#allocation3], 0
    // Predicated region
    $region2: #{motif_attention.1} parent=1 // pred_check
      _
    $region3: #{motif_attention.1} parent=1 // pred_check_branch
      %14 = sbr.rel (0) target = $region5
    $region4: #{motif_attention.1} parent=1 // pred_region
      _
    $region5: #{motif_attention.1} parent=1 // pred_fallthru
      _
    // Predicated region
    $region6: #{motif_attention.1} parent=1 // pred_check
      _
    $region7: #{motif_attention.1} parent=1 // pred_check_branch
      %16 = sbr.rel (0) target = $region9
    $region8: #{motif_attention.1} parent=1 // pred_region
      _
    $region9: #{motif_attention.1} parent=1 // pred_fallthru
      _
    // Predicated region
    $region10: #{motif_attention.1} parent=1 // pred_check
      _
    $region11: #{motif_attention.1} parent=1 // pred_check_branch
      %18 = sbr.rel (0) target = $region13
    $region12: #{motif_attention.1} parent=1 // pred_region
      _
    $region13: #{motif_attention.1} parent=1 // pred_fallthru
      _
    // Predicated region
    $region14: #{motif_attention.1} parent=1 // pred_check
      _
    $region15: #{motif_attention.1} parent=1 // pred_check_branch
      %20 = sbr.rel (0) target = $region17
    $region16: #{motif_attention.1} parent=1 // pred_region
      _
    $region17: #{motif_attention.1} parent=1 // pred_fallthru
      _
    // Predicated region
    $region18: #{motif_attention.1} parent=1 // pred_check
      _
    $region19: #{motif_attention.1} parent=1 // pred_check_branch
      %22 = sbr.rel (0) target = $region21
    $region20: #{motif_attention.1} parent=1 // pred_region
      _
    $region21: #{motif_attention.1} parent=1 // pred_fallthru
      _
    // Predicated region
    $region22: #{motif_attention.1} parent=1 // pred_check
      _
    $region23: #{motif_attention.1} parent=1 // pred_check_branch
      %24 = sbr.rel (0) target = $region25
    $region24: #{motif_attention.1} parent=1 // pred_region
      _
    $region25: #{motif_attention.1} parent=1 // pred_fallthru
      _
    // Predicated region
    $region26: #{motif_attention.1} parent=1 // pred_check
      _
    $region27: #{motif_attention.1} parent=1 // pred_check_branch
      %26 = sbr.rel (0) target = $region29
    $region28: #{motif_attention.1} parent=1 // pred_region
      _
    $region29: #{motif_attention.1} parent=1 // pred_fallthru
      _
    %v27 = vld [vmem:[%s0] sm:$0xff]
    %v28 = vld [vmem:[%s0 + $0x8] sm:$0xff]
    %v29 = vld [vmem:[%s2] sm:$0xff]
    %v30 = vld [vmem:[%s2 + $0x8] sm:$0xff]
    %v31 = vld [vmem:[%s2 + $0x10] sm:$0xff]
    %v32 = vld [vmem:[%s2 + $0x18] sm:$0xff]
    %vm33 = vcmask 261120
    %v35 = vsel %vm33, %v27, 0
    %v38 = vsel %vm33, %v28, 0
    %40 = vmatpush.msra.mxu0 0.0
    %41 = vmatpush.msra.mxu0 0.0
    %42 = vmatpush.msra.mxu0 0.0
    %43 = vmatpush.msra.mxu0 0.0
    %44 = vmatpush.msra.mxu0 0.0
    %45 = vmatpush.msra.mxu0 0.0
    %46 = vmatpush.msra.mxu0 0.0
    %47 = vmatpush.msra.mxu0 0.0
    %48 = vmatpush.msra.mxu0 0.0
    %49 = vmatpush.msra.mxu0 0.0
    %50 = vmatpush.msra.mxu0 0.0
    %51 = vmatpush.msra.mxu0 0.0
    %52 = vmatpush.msra.mxu0 %v32
    %53 = vmatpush.msra.mxu0 %v31
    %54 = vmatpush.msra.mxu0 %v30
    %55 = vmatpush.msra.mxu0 %v29
    %56 = vmatmul.f32.gmra.mxu0 %v35
    %v57 = vpop.f32.mrf.mxu0
    %v58 = vadd.f32 0.0, %v57
    %59 = vmatmul.f32.gmra.mxu0 %v38
    %v60 = vpop.f32.mrf.mxu0
    %v61 = vadd.f32 0.0, %v60
    %62 = vdwg.mxu0
    %v63 = vld [vmem:[%s3] sm:$0xf]
    %vm64 = vcmask 64512
    %v66 = vsel %vm64, %v63, 0
    %68 = vmatpush.msra.mxu0 0.0
    %69 = vmatpush.msra.mxu0 0.0
    %70 = vmatpush.msra.mxu0 0.0
    %71 = vmatpush.msra.mxu0 0.0
    %72 = vmatpush.msra.mxu0 0.0
    %73 = vmatpush.msra.mxu0 0.0
    %74 = vmatpush.msra.mxu0 0.0
    %75 = vmatpush.msra.mxu0 0.0
    %76 = vmatpush.msra.mxu0 0.0
    %77 = vmatpush.msra.mxu0 0.0
    %78 = vmatpush.msra.mxu0 0.0
    %79 = vmatpush.msra.mxu0 0.0
    %80 = vmatpush.msra.mxu0 0.0
    %81 = vmatpush.msra.mxu0 0.0
    %82 = vmatpush.msra.mxu0 0.0
    %83 = vmatpush.msra.mxu0 %v58
    %84 = vmatmul.f32.gmra.mxu0 %v66
    %v85 = vpop.f32.mrf.mxu0
    %v86 = vadd.f32 0.0, %v85
    %87 = vdwg.mxu0
    %88 = vmatpush.msra.mxu0 0.0
    %89 = vmatpush.msra.mxu0 0.0
    %90 = vmatpush.msra.mxu0 0.0
    %91 = vmatpush.msra.mxu0 0.0
    %92 = vmatpush.msra.mxu0 0.0
    %93 = vmatpush.msra.mxu0 0.0
    %94 = vmatpush.msra.mxu0 0.0
    %95 = vmatpush.msra.mxu0 0.0
    %96 = vmatpush.msra.mxu0 0.0
    %97 = vmatpush.msra.mxu0 0.0
    %98 = vmatpush.msra.mxu0 0.0
    %99 = vmatpush.msra.mxu0 0.0
    %100 = vmatpush.msra.mxu0 0.0
    %101 = vmatpush.msra.mxu0 0.0
    %102 = vmatpush.msra.mxu0 0.0
    %103 = vmatpush.msra.mxu0 %v61
    %104 = vmatmul.f32.gmra.mxu0 %v66
    %v105 = vpop.f32.mrf.mxu0
    %v106 = vadd.f32 0.0, %v105
    %107 = vdwg.mxu0
    %v108 = vlaneseq
    %v109 = vshrl.u32 %v108, 7
    %v110 = vlaneseq
    %v111 = vand.u32 %v110, 127
    %vm112 = vcmp.eq.s32.totalorder %v109, 0
    %vm113 = vcmp.eq.s32.totalorder %v111, 0
    %vm114 = vmand %vm112, %vm113
    %s116 = vtos %v86
    %v117 = vstv %s116
    %v119 = vsel %vm114, %v117, 0.0
    %v120 = vadd.f32 %v119, 0.0
    %vm121 = vcmp.eq.s32.totalorder %v111, 1
    %vm122 = vmand %vm112, %vm121
    %v124 = vrot.slane %v106, 1
    %s125 = vtos %v124
    %v126 = vstv %s125
    %v128 = vsel %vm122, %v126, 0.0
    %v129 = vadd.f32 %v120, %v128
    %vm130 = vcmp.eq.s32.totalorder %v111, 2
    %vm131 = vmand %vm112, %vm130
    %v132 = vrot.slane %v86, 2
    %133 = vrot.lane.b32.xlu0 %v132, 127
    %v134 = vpop.permute.xlu0 %133
    %s135 = vtos %v134
    %v136 = vstv %s135
    %v138 = vsel %vm131, %v136, 0.0
    %v139 = vadd.f32 %v129, %v138
    %vm140 = vcmp.eq.s32.totalorder %v111, 3
    %vm141 = vmand %vm112, %vm140
    %v142 = vrot.slane %v106, 3
    %143 = vrot.lane.b32.xlu0 %v142, 127
    %v144 = vpop.permute.xlu0 %143
    %s145 = vtos %v144
    %v146 = vstv %s145
    %v148 = vsel %vm141, %v146, 0.0
    %v149 = vadd.f32 %v139, %v148
    %vm150 = vcmp.eq.s32.totalorder %v109, 1
    %vm151 = vmand %vm150, %vm113
    %152 = vrot.lane.b32.xlu0 %v86, 126
    %v153 = vpop.permute.xlu0 %152
    %s154 = vtos %v153
    %v155 = vstv %s154
    %v157 = vsel %vm151, %v155, 0.0
    %v158 = vadd.f32 %v149, %v157
    %vm159 = vmand %vm150, %vm121
    %160 = vrot.lane.b32.xlu0 %v124, 126
    %v161 = vpop.permute.xlu0 %160
    %s162 = vtos %v161
    %v163 = vstv %s162
    %v165 = vsel %vm159, %v163, 0.0
    %v166 = vadd.f32 %v158, %v165
    %vm167 = vmand %vm150, %vm130
    %168 = vrot.lane.b32.xlu0 %v132, 125
    %v169 = vpop.permute.xlu0 %168
    %s170 = vtos %v169
    %v171 = vstv %s170
    %v173 = vsel %vm167, %v171, 0.0
    %v174 = vadd.f32 %v166, %v173
    %vm175 = vmand %vm150, %vm140
    %176 = vrot.lane.b32.xlu0 %v142, 125
    %v177 = vpop.permute.xlu0 %176
    %s178 = vtos %v177
    %v179 = vstv %s178
    %v181 = vsel %vm175, %v179, 0.0
    %v182 = vadd.f32 %v174, %v181
    %vm183 = vcmask 25600
    %v184 = vsel %vm183, %v182, -inf
    %v185 = vrot.slane %v184, 4
    %v186 = vmax.f32 %v184, %v185
    %v187 = vrot.slane %v186, 2
    %v188 = vmax.f32 %v186, %v187
    %v189 = vrot.slane %v188, 1
    %v190 = vmax.f32 %v188, %v189
    %v191 = vsub.f32 %v182, %v190
    %v192 = vmul.f32 %v191, 1.442695
    %v193 = vpow.pop %v192
    %v194 = vsel %vm183, %v193, 0.0
    %v195 = vrot.slane %v194, 4
    %v196 = vadd.f32 %v194, %v195
    %v197 = vrot.slane %v196, 2
    %v198 = vadd.f32 %v196, %v197
    %v199 = vrot.slane %v198, 1
    %v200 = vadd.f32 %v198, %v199
    %v201 = vrcp.pop %v200
    %v202 = vmul.f32 %v200, %v201
    %v203 = vsub.f32 1.0, %v202
    %v204 = vmul.f32 %v201, %v203
    %v205 = vadd.f32 %v201, %v204
    %vm206 = vweird.f32 %v200
    %vm207 = vweird.f32 %v201
    %vm208 = vmor %vm206, %vm207
    %v209 = vsel %vm208, %v201, %v205
    %v210 = vand.u32 2147483647, %v200
    %vm211 = vcmp.eq.f32.partialorder %v210, 8.507059e+37
    %v212 = vand.u32 %v200, 2147483648
    %v213 = vor.u32 1.1754944e-38, %v212
    %v214 = vsel %vm211, %v213, %v209
    %v215 = vmul.f32 %v193, %v214
    %v216 = vld [vmem:[%s4] sm:$0xf]
    %vm217 = vcmask 31744
    %v219 = vsel %vm217, %v215, 0
    %vm221 = vcmask 1043456
    %v223 = vsel %vm221, %v216, 0
    %225 = vmatpush.msra.mxu0 0.0
    %226 = vmatpush.msra.mxu0 0.0
    %227 = vmatpush.msra.mxu0 0.0
    %228 = vmatpush.msra.mxu0 0.0
    %229 = vmatpush.msra.mxu0 0.0
    %230 = vmatpush.msra.mxu0 0.0
    %231 = vmatpush.msra.mxu0 0.0
    %232 = vmatpush.msra.mxu0 0.0
    %233 = vmatpush.msra.mxu0 0.0
    %234 = vmatpush.msra.mxu0 0.0
    %235 = vmatpush.msra.mxu0 0.0
    %236 = vmatpush.msra.mxu0 0.0
    %237 = vmatpush.msra.mxu0 0.0
    %238 = vmatpush.msra.mxu0 0.0
    %239 = vmatpush.msra.mxu0 0.0
    %240 = vmatpush.msra.mxu0 %v223
    %241 = vmatmul.f32.gmra.mxu0 %v219
    %v242 = vpop.f32.mrf.mxu0
    %v243 = vadd.f32 0.0, %v242
    %244 = vdwg.mxu0
    %v245 = vld [vmem:[%s1] sm:$0xff]
    %v246 = vperm.slane %v243, 0
    %v247 = vmul.f32 %v245, %v246
    %v248 = vadd.f32 %v247, 0.0
    %s249 = scalar_lea.vmem %s1, 8
    %v250 = vld [vmem:[%s249] sm:$0xff]
    %v251 = vperm.slane %v243, 1
    %v252 = vmul.f32 %v250, %v251
    %v253 = vadd.f32 %v248, %v252
    %vm254 = vcmp.gt.f32.partialorder %v253, 0.0
    %v255 = vmin.f32 %v253, 0.0
    %v256 = vmul.f32 %v255, 1.442695
    %v257 = vpow.pop %v256
    %v258 = vsub.f32 %v257, 1.0
    %v259 = vsel %vm254, %v253, %v258
    %v260 = vld [vmem:[%s5] sm:$0xff]
    %v261 = vld [vmem:[%s5 + $0x8] sm:$0xff]
    %v262 = vld [vmem:[%s5 + $0x10] sm:$0xff]
    %v263 = vld [vmem:[%s5 + $0x18] sm:$0xff]
    %v264 = vld [vmem:[%s6] sm:$0x1]
    %v266 = vperm.slane %v264, 0
    %v269 = vsel %vm33, %v259, 0
    %v272 = vsel %vm33, %v260, 0
    %v275 = vsel %vm33, %v261, 0
    %v278 = vsel %vm33, %v262, 0
    %v281 = vsel %vm33, %v263, 0
    %283 = vmatpush.xpose.msra.mxu0 0.0
    %284 = vmatpush.xpose.msra.mxu0 0.0
    %285 = vmatpush.xpose.msra.mxu0 0.0
    %286 = vmatpush.xpose.msra.mxu0 0.0
    %287 = vmatpush.xpose.msra.mxu0 0.0
    %288 = vmatpush.xpose.msra.mxu0 0.0
    %289 = vmatpush.xpose.msra.mxu0 0.0
    %290 = vmatpush.xpose.msra.mxu0 0.0
    %291 = vmatpush.xpose.msra.mxu0 0.0
    %292 = vmatpush.xpose.msra.mxu0 0.0
    %293 = vmatpush.xpose.msra.mxu0 0.0
    %294 = vmatpush.xpose.msra.mxu0 0.0
    %295 = vmatpush.xpose.msra.mxu0 %v281
    %296 = vmatpush.xpose.msra.mxu0 %v278
    %297 = vmatpush.xpose.msra.mxu0 %v275
    %298 = vmatpush.xpose.msra.mxu0 %v272
    %299 = vmatmul.f32.gmra.mxu0 %v269
    %v300 = vpop.f32.mrf.mxu0
    %v301 = vadd.f32 %v266, %v300
    %302 = vdwg.mxu0
    %303 = vst.msk [vmem:[#allocation2] sm:$0xff] %vm33, %v301
    // Predicated region
    $region30: #{motif_attention.1} parent=1 // pred_check
      _
    $region31: #{motif_attention.1} parent=1 // pred_check_branch
      %305 = sbr.rel (0) target = $region33
    $region32: #{motif_attention.1} parent=1 // pred_region
      %307 = vsyncadd [#allocation3], 0
      %s309 = sshll.u32 [#allocation2], 4
      %s310 = int_to_ptr.vmem [resolvable:$true] %s309
      %s311 = sshll.u32 %s7, 4
      %s312 = int_to_ptr.hbm [resolvable:$true] %s311
      %314 = dma.vmem_to_hbm [thread:$0]  %s310, 128, %s312, [#allocation3]
    $region33: #{motif_attention.1} parent=1 // pred_fallthru
      _
    // Predicated region
    $region34: #{motif_attention.1} parent=1 // pred_check
      _
    $region35: #{motif_attention.1} parent=1 // pred_check_branch
      %316 = sbr.rel (0) target = $region37
    $region36: #{motif_attention.1} parent=1 // pred_region
      %318 = dma.done [#allocation3], 128
    $region37: #{motif_attention.1} parent=1 // pred_fallthru
      _
    %319 = vsyncpa [#allocation3], 1

</llo_original>
